<compile_context>
chip_gen: v6e
topology: v6e:2x2x1
jax: 0.10.0
libtpu: 0.0.40
codegen_flags: <defaults>
</compile_context>

<pallas_src>
import numpy as np
import jax
import jax.numpy as jnp
from jax.experimental import pallas as pl
from jax.experimental.pallas import tpu as pltpu


def _downsample_kernel(x_ref, p_ref, m_ref, bias_ref, o_ref):
    # x_ref   : (NB*Cin*Ho/k, k*2W)          packed row-pair view of NB images
    # p_ref   : (k*2W, k*Wo)                 constant pool selector (0 / 0.25)
    # m_ref   : (NB*Cout*Ho/k, NB*Cin*Ho/k)  kron(I_NB, kron(W^T, I_{Ho/k}))
    # bias_ref: (NB*Cout*Ho/k, 1)            per-row conv bias
    # o_ref   : (NB*Cout*Ho/k, k*Wo)         packed NCHW output block
    pooled = jnp.dot(x_ref[...], p_ref[...],
                     preferred_element_type=jnp.float32)      # avg-pool (MXU)
    mixed = jnp.dot(m_ref[...], pooled,
                    preferred_element_type=jnp.float32)       # 1x1 conv (MXU)
    o_ref[...] = (mixed + bias_ref[...]).astype(o_ref.dtype)  # bias, 1 store


def _pick_k(W, Ho):
    """Smallest divisor k of Ho with k*2W >= 128 (else the largest divisor)."""
    target = max(1, -(-128 // (2 * W)))
    best = 1
    for k in range(1, Ho + 1):
        if Ho % k == 0:
            best = k
            if k >= target:
                return k
    return best


def downsample(x_nchw, w_io, bias, stride=2):
    """AvgPool2d(2, 2, ceil_mode=True, count_include_pad=False) + 1x1 conv.

    x_nchw: (N, Cin, H, W), w_io: (Cin, Cout) == torch conv weight transposed,
    bias: (Cout,).  Returns (N, Cout, Ho, Wo) in NCHW directly.
    """
    N, C, H, W = x_nchw.shape
    assert stride == 2
    # TODO(synk): ceil_mode partial windows (odd H/W, per-window divisors 1/2/4)
    # and the stride==1 / dilation>1 (Identity / AvgPool2dSame) branches of the
    # timm module are not implemented; only the stride=2, dilation=1 path is.
    assert H % 2 == 0 and W % 2 == 0
    Ho, Wo = H // 2, W // 2
    Cout = w_io.shape[1]

    k = _pick_k(W, Ho)                       # lane-packing factor (k | Ho)
    rows_in = C * Ho // k                    # packed rows per image (input)
    rows_out = Cout * Ho // k                # packed rows per image (output)

    # Grid: 2 parallel fat blocks when the batch splits cleanly (keeps both
    # v7x TensorCores busy); otherwise a single block with the whole batch
    # folded into the matmul M dimension.
    G = 1
    if N >= 2 and N % 2 == 0:
        nb = N // 2
        if (nb * rows_in) % 8 == 0 and (nb * rows_out) % 8 == 0:
            G = 2
    NB = N // G

    # Free reshape: row = (n, c, ho//k), lane = (ho%k)*2W + row_pair*W + w.
    x2 = x_nchw.reshape(N * rows_in, 2 * k * W)

    # Constant pool selector with the 1/4 average divisor folded in:
    # p4[j, wo] = 0.25 iff (j % W)//2 == wo ;  P = kron(I_k, p4).
    j = np.arange(2 * W)
    p4 = 0.25 * (((j % W) // 2)[:, None] == np.arange(Wo)[None, :])
    P = jnp.asarray(np.kron(np.eye(k), p4), dtype=jnp.float32)   # (k*2W, k*Wo)

    # Channel-mix matrix for the 1x1 conv (built once per call from weights).
    eye_h = jnp.eye(Ho // k, dtype=jnp.float32)
    m_img = jnp.kron(w_io.T.astype(jnp.float32), eye_h)          # (rows_out, rows_in)
    m_all = jnp.kron(jnp.eye(NB, dtype=jnp.float32), m_img) if NB > 1 else m_img

    # Bias as a lane-broadcast column: row (b, co, hh) -> bias[co].
    bias_col = jnp.tile(jnp.repeat(bias.astype(jnp.float32), Ho // k), NB)[:, None]

    flops = (2 * (N * rows_in) * (2 * k * W) * (k * Wo)
             + 2 * G * (NB * rows_out) * (NB * rows_in) * (k * Wo))
    bytes_accessed = 4 * (N * rows_in * 2 * k * W
                          + P.size + m_all.size + NB * rows_out
                          + N * rows_out * k * Wo)

    out2 = pl.pallas_call(
        _downsample_kernel,
        out_shape=jax.ShapeDtypeStruct((N * rows_out, k * Wo), x_nchw.dtype),
        grid=(G,),
        in_specs=[
            pl.BlockSpec((NB * rows_in, 2 * k * W), lambda g: (g, 0)),
            pl.BlockSpec((2 * k * W, k * Wo), lambda g: (0, 0)),       # constant
            pl.BlockSpec((NB * rows_out, NB * rows_in), lambda g: (0, 0)),
            pl.BlockSpec((NB * rows_out, 1), lambda g: (0, 0)),
        ],
        out_specs=pl.BlockSpec((NB * rows_out, k * Wo), lambda g: (g, 0)),
        compiler_params=pltpu.CompilerParams(
            dimension_semantics=("parallel",)),
        cost_estimate=pl.CostEstimate(flops=flops, transcendentals=0,
                                      bytes_accessed=bytes_accessed),
    )(x2, P, m_all, bias_col)

    # Free reshape back to NCHW: rows (n, co, ho//k) x lanes (ho%k, wo).
    return out2.reshape(N, Cout, Ho, Wo)


def _reference(x_nchw, w_io, bias):
    N, C, H, W = x_nchw.shape
    Ho, Wo = H // 2, W // 2
    x = jnp.transpose(x_nchw, (0, 2, 3, 1))
    pooled = x.reshape(N, Ho, 2, Wo, 2, C).mean(axis=(2, 4))      # (N,Ho,Wo,C)
    y = jnp.einsum("nhwc,co->nhwo", pooled, w_io) + bias
    return jnp.transpose(y, (0, 3, 1, 2))


if __name__ == "__main__":
    key = jax.random.PRNGKey(0)
    kx, kw, kb = jax.random.split(key, 3)

    N, Cin, Cout, H, W = 2, 4, 8, 16, 16
    x = jax.random.normal(kx, (N, Cin, H, W), dtype=jnp.float32)

    # PyTorch conv weight is (Cout, Cin, 1, 1); stored here directly as the
    # equivalent matmul weight (Cin, Cout).
    w_io = jax.random.normal(kw, (Cin, Cout), dtype=jnp.float32) * 0.1
    bias = jax.random.normal(kb, (Cout,), dtype=jnp.float32) * 0.1

    out = downsample(x, w_io, bias, stride=2)
    out = jax.block_until_ready(out)

    ref = _reference(x, w_io, bias)
    assert out.shape == (N, Cout, H // 2, W // 2), out.shape
    assert jnp.allclose(out, ref, atol=1e-5, rtol=1e-5), \
        float(jnp.max(jnp.abs(out - ref)))

    print("KERNEL_OK")
</pallas_src>

<mosaic_0001>
module attributes {stable_mosaic.version = 11 : i64} {
  func.func @_downsample_kernel(%arg0: i32, %arg1: memref<8x128xf32, #tpu.memory_space<vmem>>, %arg2: memref<128x32xf32, #tpu.memory_space<vmem>>, %arg3: memref<16x8xf32, #tpu.memory_space<vmem>>, %arg4: memref<16x1xf32, #tpu.memory_space<vmem>>, %arg5: memref<16x32xf32, #tpu.memory_space<vmem>>) attributes {dimension_semantics = [#tpu.dimension_semantics<parallel>], iteration_bounds = array<i64: 2>, scalar_prefetch = 0 : i64, scratch_operands = 0 : i64, tpu.core_type = #tpu.core_type<tc>, window_params = [{transform_indices = @transform_0, window_bounds = array<i64: 8, 128>}, {pipeline_mode = #tpu.pipeline_mode<synchronous>, transform_indices = @transform_1, window_bounds = array<i64: 128, 32>}, {pipeline_mode = #tpu.pipeline_mode<synchronous>, transform_indices = @transform_2, window_bounds = array<i64: 16, 8>}, {pipeline_mode = #tpu.pipeline_mode<synchronous>, transform_indices = @transform_3, window_bounds = array<i64: 16, 1>}, {transform_indices = @transform_4, window_bounds = array<i64: 16, 32>}]} {
    %c0 = arith.constant 0 : index
    %c0_0 = arith.constant 0 : index
    %0 = vector.load %arg1[%c0, %c0_0] : memref<8x128xf32, #tpu.memory_space<vmem>>, vector<8x128xf32>
    %c0_1 = arith.constant 0 : index
    %c0_2 = arith.constant 0 : index
    %1 = vector.load %arg2[%c0_1, %c0_2] : memref<128x32xf32, #tpu.memory_space<vmem>>, vector<128x32xf32>
    %cst = arith.constant dense<0.000000e+00> : vector<8x32xf32>
    %2 = tpu.matmul %0, %1, %cst {dimension_numbers = #tpu.dot_dimension_numbers<[1], [0], [0], [1], [0, 0, 1, 1], [], []>} : vector<8x128xf32>, vector<128x32xf32>, vector<8x32xf32> -> vector<8x32xf32>
    %c0_3 = arith.constant 0 : index
    %c0_4 = arith.constant 0 : index
    %3 = vector.load %arg3[%c0_3, %c0_4] : memref<16x8xf32, #tpu.memory_space<vmem>>, vector<16x8xf32>
    %cst_5 = arith.constant dense<0.000000e+00> : vector<16x32xf32>
    %4 = tpu.matmul %3, %2, %cst_5 {dimension_numbers = #tpu.dot_dimension_numbers<[1], [0], [0], [1], [0, 0, 1, 1], [], []>} : vector<16x8xf32>, vector<8x32xf32>, vector<16x32xf32> -> vector<16x32xf32>
    %c0_6 = arith.constant 0 : index
    %c0_7 = arith.constant 0 : index
    %5 = vector.load %arg4[%c0_6, %c0_7] : memref<16x1xf32, #tpu.memory_space<vmem>>, vector<16x1xf32>
    %6 = vector.broadcast %5 : vector<16x1xf32> to vector<16x32xf32>
    %7 = arith.addf %4, %6 : vector<16x32xf32>
    %c0_8 = arith.constant 0 : index
    %c0_9 = arith.constant 0 : index
    %8 = vector.load %arg5[%c0_8, %c0_9] : memref<16x32xf32, #tpu.memory_space<vmem>>, vector<16x32xf32>
    tpu.vector_store %arg5[%c0_8, %c0_9], %7 {strides = array<i32>} : memref<16x32xf32, #tpu.memory_space<vmem>>, vector<16x32xf32>,
    return
  }
  func.func @transform_0(%arg0: i32) -> (i32, i32) {
    %c0_i32 = arith.constant 0 : i32
    %c0_i32_0 = arith.constant 0 : i32
    return %arg0, %c0_i32 : i32, i32
  }
  func.func @transform_1(%arg0: i32) -> (i32, i32) {
    %c0_i32 = arith.constant 0 : i32
    %c0_i32_0 = arith.constant 0 : i32
    %c0_i32_1 = arith.constant 0 : i32
    return %c0_i32, %c0_i32_0 : i32, i32
  }
  func.func @transform_2(%arg0: i32) -> (i32, i32) {
    %c0_i32 = arith.constant 0 : i32
    %c0_i32_0 = arith.constant 0 : i32
    %c0_i32_1 = arith.constant 0 : i32
    return %c0_i32, %c0_i32_0 : i32, i32
  }
  func.func @transform_3(%arg0: i32) -> (i32, i32) {
    %c0_i32 = arith.constant 0 : i32
    %c0_i32_0 = arith.constant 0 : i32
    %c0_i32_1 = arith.constant 0 : i32
    return %c0_i32, %c0_i32_0 : i32, i32
  }
  func.func @transform_4(%arg0: i32) -> (i32, i32) {
    %c0_i32 = arith.constant 0 : i32
    %c0_i32_0 = arith.constant 0 : i32
    return %arg0, %c0_i32 : i32, i32
  }
}

</mosaic_0001>

<llo_original>
// kernel: tpu_custom_call.1
$region0: #{tpu_custom_call.1}
  #allocation0 [shape = 'u32[]', space=smem, size = 0x4, offset = 0x4, fixed_abs, tag = 'smem constant byte address 0x4 - core index']
  #allocation1 [shape = 'u32[144,128]{1,0:T(1,128)}', space=vmem, size = 0x12000, scoped, tag = 'internal scratch']
  %s0 = inlined_call_operand.vmem [shape: f32[16,128], index: 0, kind: input, shape index: {}]
  %s1 = inlined_call_operand.vmem [shape: f32[128,32], index: 1, kind: input, shape index: {}]
  %s2 = inlined_call_operand.vmem [shape: f32[16,8], index: 2, kind: input, shape index: {}]
  %s3 = inlined_call_operand.vmem [shape: f32[16,1], index: 3, kind: input, shape index: {}]
  %s4 = inlined_call_operand.hbm [shape: f32[32,32], index: 4, kind: output, shape index: {}]
  %s5 = sld [smem:[#allocation0]]
  $region49: #{tpu_custom_call.1} parent=0
    _
  %s7 = ssub.s32 1, %s5
  %s8 = scalar_select 0, %s7, %s5
  $region1: #{tpu_custom_call.1} parent=0
    #allocation2 [shape = 'u8[16384]{0}', space=vmem, size = 0x4000, scoped, tag = 'output window, operand 0']
    #allocation3 [shape = 's32[2]{0}', space=sflag, size = 0x8, scoped, tag = 'scoped memory for tpu_custom_call.1']
    %9 = vsyncpa [#allocation3], 0
    %s10 = scalar_lea.sflag [#allocation3], 1
    %11 = vsyncpa %s10, 0
    loop: start=0, step=1, limit=4
    $region2: #{tpu_custom_call.1} parent=1 // loop_pre_header
      _
    $region3: #{tpu_custom_call.1} parent=1 // loop_header
      %s13 = sphi 0, %s17
      %p14 = scmp.ge.s32.totalorder %s13, 4
      %s23 = sphi 0, %s25
      %s26 = sphi 0, %s23
      %s27 = sphi 0, %s26
      %s43 = sphi 0, %s27
      %s47 = sphi 0, %s47
      %s49 = sphi 0, %s47
      %s50 = sphi 0, %s49
      %s64 = sphi 0, %s50
      %s68 = sphi 0, %s68
      %s70 = sphi 0, %s68
      %s71 = sphi 0, %s70
      %s85 = sphi 0, %s71
      %s89 = sphi 0, %s89
      %s91 = sphi 0, %s89
      %s92 = sphi 0, %s91
      %s106 = sphi 0, %s92
      %s112 = sphi 0, %s114
      %s115 = sphi 0, %s112
      %s116 = sphi 0, %s115
      %s132 = sphi 0, %s116
    $region4: #{tpu_custom_call.1} parent=1 // loop_header_branch
      %16 = sbr.rel (%p14) target = $region8
    $region5: #{tpu_custom_call.1} parent=1 // loop_body
      %s18 = ssub.s32 %s13, 1
      %s19 = ssub.s32 %s13, 2
      %s20 = sadd.s32 %s13, 1
      %s21 = ssub.s32 %s13, %s20
      %p22 = scmp.eq.s32.totalorder %s21, 0
      %s24 = sadd.s32 %s23, 1
      %s25 = scalar_select %p22, %s23, %s24
      %p28 = pneg %p22
      %p29 = scmp.eq.s32.totalorder %s13, 1
      %p30 = por %p28, %p29
      %p31 = scmp.ne.s32.totalorder %s23, %s26
      %p32 = scmp.eq.s32.totalorder %s13, 0
      %p33 = por %p31, %p32
      %p34 = scmp.ne.s32.totalorder %s23, %s26
      %p35 = scmp.eq.s32.totalorder %s18, 1
      %p36 = por %p34, %p35
      %p37 = scmp.ne.s32.totalorder %s26, %s27
      %p38 = scmp.eq.s32.totalorder %s18, 0
      %p39 = por %p37, %p38
      %p40 = scmp.ne.s32.totalorder %s26, %s27
      %p41 = scmp.eq.s32.totalorder %s19, 1
      %p42 = por %p40, %p41
      %p44 = scmp.ne.s32.totalorder %s27, %s43
      %p45 = scmp.eq.s32.totalorder %s19, 0
      %p46 = por %p44, %p45
      %s48 = sadd.s32 %s47, 1
      %p51 = scmp.eq.s32.totalorder %s13, 1
      %p52 = scmp.ne.s32.totalorder %s47, %s49
      %p53 = scmp.eq.s32.totalorder %s13, 0
      %p54 = por %p52, %p53
      %p55 = scmp.ne.s32.totalorder %s47, %s49
      %p56 = scmp.eq.s32.totalorder %s18, 1
      %p57 = por %p55, %p56
      %p58 = scmp.ne.s32.totalorder %s49, %s50
      %p59 = scmp.eq.s32.totalorder %s18, 0
      %p60 = por %p58, %p59
      %p61 = scmp.ne.s32.totalorder %s49, %s50
      %p62 = scmp.eq.s32.totalorder %s19, 1
      %p63 = por %p61, %p62
      %p65 = scmp.ne.s32.totalorder %s50, %s64
      %p66 = scmp.eq.s32.totalorder %s19, 0
      %p67 = por %p65, %p66
      %s69 = sadd.s32 %s68, 1
      %p72 = scmp.eq.s32.totalorder %s13, 1
      %p73 = scmp.ne.s32.totalorder %s68, %s70
      %p74 = scmp.eq.s32.totalorder %s13, 0
      %p75 = por %p73, %p74
      %p76 = scmp.ne.s32.totalorder %s68, %s70
      %p77 = scmp.eq.s32.totalorder %s18, 1
      %p78 = por %p76, %p77
      %p79 = scmp.ne.s32.totalorder %s70, %s71
      %p80 = scmp.eq.s32.totalorder %s18, 0
      %p81 = por %p79, %p80
      %p82 = scmp.ne.s32.totalorder %s70, %s71
      %p83 = scmp.eq.s32.totalorder %s19, 1
      %p84 = por %p82, %p83
      %p86 = scmp.ne.s32.totalorder %s71, %s85
      %p87 = scmp.eq.s32.totalorder %s19, 0
      %p88 = por %p86, %p87
      %s90 = sadd.s32 %s89, 1
      %p93 = scmp.eq.s32.totalorder %s13, 1
      %p94 = scmp.ne.s32.totalorder %s89, %s91
      %p95 = scmp.eq.s32.totalorder %s13, 0
      %p96 = por %p94, %p95
      %p97 = scmp.ne.s32.totalorder %s89, %s91
      %p98 = scmp.eq.s32.totalorder %s18, 1
      %p99 = por %p97, %p98
      %p100 = scmp.ne.s32.totalorder %s91, %s92
      %p101 = scmp.eq.s32.totalorder %s18, 0
      %p102 = por %p100, %p101
      %p103 = scmp.ne.s32.totalorder %s91, %s92
      %p104 = scmp.eq.s32.totalorder %s19, 1
      %p105 = por %p103, %p104
      %p107 = scmp.ne.s32.totalorder %s92, %s106
      %p108 = scmp.eq.s32.totalorder %s19, 0
      %p109 = por %p107, %p108
      %s110 = ssub.s32 %s13, %s20
      %p111 = scmp.eq.s32.totalorder %s110, 0
      %s113 = sadd.s32 %s112, 1
      %s114 = scalar_select %p111, %s112, %s113
      %p117 = pneg %p111
      %p118 = scmp.eq.s32.totalorder %s13, 1
      %p119 = por %p117, %p118
      %p120 = scmp.ne.s32.totalorder %s112, %s115
      %p121 = scmp.eq.s32.totalorder %s13, 0
      %p122 = por %p120, %p121
      %p123 = scmp.ne.s32.totalorder %s112, %s115
      %p124 = scmp.eq.s32.totalorder %s18, 1
      %p125 = por %p123, %p124
      %p126 = scmp.ne.s32.totalorder %s115, %s116
      %p127 = scmp.eq.s32.totalorder %s18, 0
      %p128 = por %p126, %p127
      %p129 = scmp.ne.s32.totalorder %s115, %s116
      %p130 = scmp.eq.s32.totalorder %s19, 1
      %p131 = por %p129, %p130
      %p133 = scmp.ne.s32.totalorder %s116, %s132
      %p134 = scmp.eq.s32.totalorder %s19, 0
      %p135 = por %p133, %p134
      %p136 = scmp.le.s32.totalorder 1, %s13
      %p137 = scmp.lt.s32.totalorder %s13, 3
      %p138 = pnand %p136, %p137
      %p139 = pneg %p138
      // Predicated region
      $region9: #{tpu_custom_call.1} parent=5 // pred_check
        _
      $region10: #{tpu_custom_call.1} parent=5 // pred_check_branch
        %141 = sbr.rel (%p138) target = $region12
      $region11: #{tpu_custom_call.1} parent=5 // pred_region
        %s142 = ssub.s32 %s13, 1
        // Predicated region
        $region13: #{tpu_custom_call.1} parent=11 // pred_check
          %p143 = pneg %p60
        $region14: #{tpu_custom_call.1} parent=11 // pred_check_branch
          %145 = sbr.rel (%p143) target = $region16
        $region15: #{tpu_custom_call.1} parent=11 // pred_region
          _
        $region16: #{tpu_custom_call.1} parent=11 // pred_fallthru
          _
        // Predicated region
        $region17: #{tpu_custom_call.1} parent=11 // pred_check
          %p146 = pneg %p81
        $region18: #{tpu_custom_call.1} parent=11 // pred_check_branch
          %148 = sbr.rel (%p146) target = $region20
        $region19: #{tpu_custom_call.1} parent=11 // pred_region
          _
        $region20: #{tpu_custom_call.1} parent=11 // pred_fallthru
          _
        // Predicated region
        $region21: #{tpu_custom_call.1} parent=11 // pred_check
          %p149 = pneg %p102
        $region22: #{tpu_custom_call.1} parent=11 // pred_check_branch
          %151 = sbr.rel (%p149) target = $region24
        $region23: #{tpu_custom_call.1} parent=11 // pred_region
          _
        $region24: #{tpu_custom_call.1} parent=11 // pred_fallthru
          _
      $region12: #{tpu_custom_call.1} parent=5 // pred_fallthru
        _
      %p152 = scmp.lt.s32.totalorder %s13, 2
      // Predicated region
      $region25: #{tpu_custom_call.1} parent=5 // pred_check
        %p153 = pneg %p152
      $region26: #{tpu_custom_call.1} parent=5 // pred_check_branch
        %155 = sbr.rel (%p153) target = $region28
      $region27: #{tpu_custom_call.1} parent=5 // pred_region
        // Predicated region
        $region29: #{tpu_custom_call.1} parent=27 // pred_check
          %p156 = pneg %p33
        $region30: #{tpu_custom_call.1} parent=27 // pred_check_branch
          %158 = sbr.rel (%p156) target = $region32
        $region31: #{tpu_custom_call.1} parent=27 // pred_region
          %p159 = scmp.lt.s32.totalorder %s13, 1
          %s160 = scalar_select %p159, %s13, 1
          %s161 = smul.addr %s160, 8
          %s162 = scalar_lea.vmem %s0, %s161
        $region32: #{tpu_custom_call.1} parent=27 // pred_fallthru
          _
      $region28: #{tpu_custom_call.1} parent=5 // pred_fallthru
        _
      %p163 = scmp.le.s32.totalorder 1, %s13
      %p164 = scmp.lt.s32.totalorder %s13, 3
      %p165 = pnand %p163, %p164
      %p166 = pneg %p165
      // Predicated region
      $region33: #{tpu_custom_call.1} parent=5 // pred_check
        _
      $region34: #{tpu_custom_call.1} parent=5 // pred_check_branch
        %168 = sbr.rel (%p165) target = $region36
      $region35: #{tpu_custom_call.1} parent=5 // pred_region
        %s169 = ssub.s32 %s13, 1
        %p170 = scmp.lt.s32.totalorder %s18, 1
        %s171 = scalar_select %p170, %s18, 1
        %s172 = smul.addr %s171, 8
        %s173 = scalar_lea.vmem %s0, %s172
        %p174 = pneg %p39
        %p175 = pneg %p36
        %p176 = pneg %p60
        %p177 = pneg %p57
        %p178 = pneg %p81
        %p179 = pneg %p78
        %p180 = pneg %p102
        %p181 = pneg %p99
        %p182 = pneg %p128
        %p183 = pneg %p125
        %s184 = sand.u32 %s115, 1
        %s185 = scalar_lea.sflag [#allocation3], %s184
        %s186 = sand.u32 %s115, 1
        %s187 = smul.addr %s186, 16
        %s188 = scalar_lea.vmem [#allocation2], %s187
        %p189 = scmp.lt.s32.totalorder %s18, 1
        %s190 = scalar_select %p189, %s18, 1
        %s191 = smul.addr %s190, 8
        %s192 = scalar_lea.vmem %s0, %s191
        %s193 = smul.u32 2, %s18
        %v194 = vld [vmem:[%s192] sm:$0xff]
        %v195 = vld [vmem:[%s1] sm:$0xff]
        %v196 = vld [vmem:[%s1 + $0x8] sm:$0xff]
        %v197 = vld [vmem:[%s1 + $0x10] sm:$0xff]
        %v198 = vld [vmem:[%s1 + $0x18] sm:$0xff]
        %v199 = vld [vmem:[%s1 + $0x20] sm:$0xff]
        %v200 = vld [vmem:[%s1 + $0x28] sm:$0xff]
        %v201 = vld [vmem:[%s1 + $0x30] sm:$0xff]
        %v202 = vld [vmem:[%s1 + $0x38] sm:$0xff]
        %v203 = vld [vmem:[%s1 + $0x40] sm:$0xff]
        %v204 = vld [vmem:[%s1 + $0x48] sm:$0xff]
        %v205 = vld [vmem:[%s1 + $0x50] sm:$0xff]
        %v206 = vld [vmem:[%s1 + $0x58] sm:$0xff]
        %v207 = vld [vmem:[%s1 + $0x60] sm:$0xff]
        %v208 = vld [vmem:[%s1 + $0x68] sm:$0xff]
        %v209 = vld [vmem:[%s1 + $0x70] sm:$0xff]
        %v210 = vld [vmem:[%s1 + $0x78] sm:$0xff]
        %211 = vmatprep.subr.mxu0 0.0
        %212 = vmatpush1.msra.mxu0 %v210
        %213 = vmatprep.subr.mxu0 0.0
        %214 = vmatpush1.msra.mxu0 %v209
        %215 = vmatprep.subr.mxu0 0.0
        %216 = vmatpush1.msra.mxu0 %v208
        %217 = vmatprep.subr.mxu0 0.0
        %218 = vmatpush1.msra.mxu0 %v207
        %219 = vmatprep.subr.mxu0 0.0
        %220 = vmatpush1.msra.mxu0 %v206
        %221 = vmatprep.subr.mxu0 0.0
        %222 = vmatpush1.msra.mxu0 %v205
        %223 = vmatprep.subr.mxu0 0.0
        %224 = vmatpush1.msra.mxu0 %v204
        %225 = vmatprep.subr.mxu0 0.0
        %226 = vmatpush1.msra.mxu0 %v203
        %227 = vmatprep.subr.mxu0 0.0
        %228 = vmatpush1.msra.mxu0 %v202
        %229 = vmatprep.subr.mxu0 0.0
        %230 = vmatpush1.msra.mxu0 %v201
        %231 = vmatprep.subr.mxu0 0.0
        %232 = vmatpush1.msra.mxu0 %v200
        %233 = vmatprep.subr.mxu0 0.0
        %234 = vmatpush1.msra.mxu0 %v199
        %235 = vmatprep.subr.mxu0 0.0
        %236 = vmatpush1.msra.mxu0 %v198
        %237 = vmatprep.subr.mxu0 0.0
        %238 = vmatpush1.msra.mxu0 %v197
        %239 = vmatprep.subr.mxu0 0.0
        %240 = vmatpush1.msra.mxu0 %v196
        %241 = vmatprep.subr.mxu0 0.0
        %242 = vmatpush1.msra.mxu0 %v195
        %243 = vmatprep.subr.mxu0 0.0
        %244 = vmatpush2.msra.mxu0 0.0
        %245 = vmatprep.subr.mxu0 0.0
        %246 = vmatpush2.msra.mxu0 0.0
        %247 = vmatprep.subr.mxu0 0.0
        %248 = vmatpush2.msra.mxu0 0.0
        %249 = vmatprep.subr.mxu0 0.0
        %250 = vmatpush2.msra.mxu0 0.0
        %251 = vmatprep.subr.mxu0 0.0
        %252 = vmatpush2.msra.mxu0 0.0
        %253 = vmatprep.subr.mxu0 0.0
        %254 = vmatpush2.msra.mxu0 0.0
        %255 = vmatprep.subr.mxu0 0.0
        %256 = vmatpush2.msra.mxu0 0.0
        %257 = vmatprep.subr.mxu0 0.0
        %258 = vmatpush2.msra.mxu0 0.0
        %259 = vmatprep.subr.mxu0 0.0
        %260 = vmatpush2.msra.mxu0 0.0
        %261 = vmatprep.subr.mxu0 0.0
        %262 = vmatpush2.msra.mxu0 0.0
        %263 = vmatprep.subr.mxu0 0.0
        %264 = vmatpush2.msra.mxu0 0.0
        %265 = vmatprep.subr.mxu0 0.0
        %266 = vmatpush2.msra.mxu0 0.0
        %267 = vmatprep.subr.mxu0 0.0
        %268 = vmatpush2.msra.mxu0 0.0
        %269 = vmatprep.subr.mxu0 0.0
        %270 = vmatpush2.msra.mxu0 0.0
        %271 = vmatprep.subr.mxu0 0.0
        %272 = vmatpush2.msra.mxu0 0.0
        %273 = vmatprep.subr.mxu0 0.0
        %274 = vmatpush2.msra.mxu0 0.0
        %275 = vmatprep.mubr.f32.mxu0 0.0
        %276 = vmatmul.mubr.f32.gmra.mxu0 %v194
        %v277 = vpop.f32.mrf.mxu0
        %v278 = vadd.f32 0.0, %v277
        %v279 = vpop.f32.mrf.mxu0
        %280 = vdwg.mxu0
        %v281 = vld [vmem:[%s2] sm:$0xff]
        %v282 = vld [vmem:[%s2 + $0x8] sm:$0xff]
        %v283 = vld [vmem:[%s3] sm:$0xff]
        %v284 = vld [vmem:[%s3 + $0x8] sm:$0xff]
        %286 = vset.pattern.permute.xlu0 0
        %287 = vperm.xlu0 %286, %v283
        %v288 = vpop.permute.xlu0 %287
        %291 = vset.pattern.permute.xlu0 0
        %292 = vperm.xlu0 %291, %v284
        %v293 = vpop.permute.xlu0 %292
        %vm295 = vcmask 64512
        %v297 = vsel %vm295, %v281, 0
        %v300 = vsel %vm295, %v282, 0
        %302 = vmatprep.subr.mxu0 0.0
        %303 = vmatpush1.msra.mxu0 0.0
        %304 = vmatprep.subr.mxu0 0.0
        %305 = vmatpush1.msra.mxu0 0.0
        %306 = vmatprep.subr.mxu0 0.0
        %307 = vmatpush1.msra.mxu0 0.0
        %308 = vmatprep.subr.mxu0 0.0
        %309 = vmatpush1.msra.mxu0 0.0
        %310 = vmatprep.subr.mxu0 0.0
        %311 = vmatpush1.msra.mxu0 0.0
        %312 = vmatprep.subr.mxu0 0.0
        %313 = vmatpush1.msra.mxu0 0.0
        %314 = vmatprep.subr.mxu0 0.0
        %315 = vmatpush1.msra.mxu0 0.0
        %316 = vmatprep.subr.mxu0 0.0
        %317 = vmatpush1.msra.mxu0 0.0
        %318 = vmatprep.subr.mxu0 0.0
        %319 = vmatpush1.msra.mxu0 0.0
        %320 = vmatprep.subr.mxu0 0.0
        %321 = vmatpush1.msra.mxu0 0.0
        %322 = vmatprep.subr.mxu0 0.0
        %323 = vmatpush1.msra.mxu0 0.0
        %324 = vmatprep.subr.mxu0 0.0
        %325 = vmatpush1.msra.mxu0 0.0
        %326 = vmatprep.subr.mxu0 0.0
        %327 = vmatpush1.msra.mxu0 0.0
        %328 = vmatprep.subr.mxu0 0.0
        %329 = vmatpush1.msra.mxu0 0.0
        %330 = vmatprep.subr.mxu0 0.0
        %331 = vmatpush1.msra.mxu0 0.0
        %332 = vmatprep.subr.mxu0 0.0
        %333 = vmatpush1.msra.mxu0 %v278
        %334 = vmatprep.subr.mxu0 0.0
        %335 = vmatpush2.msra.mxu0 0.0
        %336 = vmatprep.subr.mxu0 0.0
        %337 = vmatpush2.msra.mxu0 0.0
        %338 = vmatprep.subr.mxu0 0.0
        %339 = vmatpush2.msra.mxu0 0.0
        %340 = vmatprep.subr.mxu0 0.0
        %341 = vmatpush2.msra.mxu0 0.0
        %342 = vmatprep.subr.mxu0 0.0
        %343 = vmatpush2.msra.mxu0 0.0
        %344 = vmatprep.subr.mxu0 0.0
        %345 = vmatpush2.msra.mxu0 0.0
        %346 = vmatprep.subr.mxu0 0.0
        %347 = vmatpush2.msra.mxu0 0.0
        %348 = vmatprep.subr.mxu0 0.0
        %349 = vmatpush2.msra.mxu0 0.0
        %350 = vmatprep.subr.mxu0 0.0
        %351 = vmatpush2.msra.mxu0 0.0
        %352 = vmatprep.subr.mxu0 0.0
        %353 = vmatpush2.msra.mxu0 0.0
        %354 = vmatprep.subr.mxu0 0.0
        %355 = vmatpush2.msra.mxu0 0.0
        %356 = vmatprep.subr.mxu0 0.0
        %357 = vmatpush2.msra.mxu0 0.0
        %358 = vmatprep.subr.mxu0 0.0
        %359 = vmatpush2.msra.mxu0 0.0
        %360 = vmatprep.subr.mxu0 0.0
        %361 = vmatpush2.msra.mxu0 0.0
        %362 = vmatprep.subr.mxu0 0.0
        %363 = vmatpush2.msra.mxu0 0.0
        %364 = vmatprep.subr.mxu0 0.0
        %365 = vmatpush2.msra.mxu0 0.0
        %366 = vmatprep.mubr.f32.mxu0 0.0
        %367 = vmatmul.mubr.f32.gmra.mxu0 %v297
        %v368 = vpop.f32.mrf.mxu0
        %v369 = vadd.f32 %v288, %v368
        %v370 = vpop.f32.mrf.mxu0
        %371 = vmatprep.mubr.f32.mxu0 0.0
        %372 = vmatmul.mubr.f32.gmra.mxu0 %v300
        %v373 = vpop.f32.mrf.mxu0
        %v374 = vadd.f32 %v293, %v373
        %v375 = vpop.f32.mrf.mxu0
        %376 = vdwg.mxu0
        %vm377 = vcmask 261120
        %378 = vst.msk [vmem:[%s188] sm:$0xff] %vm377, %v369
        %379 = vst.msk [vmem:[%s188 + $0x8] sm:$0xff] %vm377, %v374
        %s380 = sand.u32 %s115, 1
        %s381 = scalar_lea.sflag [#allocation3], %s380
        %s382 = sand.u32 %s115, 1
        %s383 = smul.addr %s382, 16
        %s384 = scalar_lea.vmem [#allocation2], %s383
        // Predicated region
        $region37: #{tpu_custom_call.1} parent=35 // pred_check
          %p385 = pneg %p125
        $region38: #{tpu_custom_call.1} parent=35 // pred_check_branch
          %387 = sbr.rel (%p385) target = $region40
        $region39: #{tpu_custom_call.1} parent=35 // pred_region
          %s388 = smul.u32 2, %s18
          %s390 = ssub.s32 256, 256
          %391 = vsyncadd %s381, %s390
          %s392 = smul.addr %s388, 128
          %s393 = scalar_lea.hbm %s4, %s392
          %s394 = sshll.u32 %s384, 4
          %s395 = int_to_ptr.vmem [resolvable:$true] %s394
          %400 = dma.vmem_to_hbm [thread:$0]  %s395, 256, %s393, %s381, 128, 128, 8
        $region40: #{tpu_custom_call.1} parent=35 // pred_fallthru
          _
      $region36: #{tpu_custom_call.1} parent=5 // pred_fallthru
        _
      %p401 = scmp.le.s32.totalorder 2, %s13
      // Predicated region
      $region41: #{tpu_custom_call.1} parent=5 // pred_check
        %p402 = pneg %p401
      $region42: #{tpu_custom_call.1} parent=5 // pred_check_branch
        %404 = sbr.rel (%p402) target = $region44
      $region43: #{tpu_custom_call.1} parent=5 // pred_region
        %s405 = ssub.s32 %s13, 2
        // Predicated region
        $region45: #{tpu_custom_call.1} parent=43 // pred_check
          %p406 = pneg %p131
        $region46: #{tpu_custom_call.1} parent=43 // pred_check_branch
          %408 = sbr.rel (%p406) target = $region48
        $region47: #{tpu_custom_call.1} parent=43 // pred_region
          %s409 = sand.u32 %s116, 1
          %s410 = scalar_lea.sflag [#allocation3], %s409
          %s411 = sand.u32 %s116, 1
          %s412 = smul.addr %s411, 16
          %s413 = scalar_lea.vmem [#allocation2], %s412
          %414 = dma.done %s410, 256
        $region48: #{tpu_custom_call.1} parent=43 // pred_fallthru
          _
      $region44: #{tpu_custom_call.1} parent=5 // pred_fallthru
        _
    $region6: #{tpu_custom_call.1} parent=1 // loop_footer
      %s17 = sadd.s32 1, %s13
    $region7: #{tpu_custom_call.1} parent=1 // loop_footer_branch
      %12 = sbr.rel target = $region3
    $region8: #{tpu_custom_call.1} parent=1 // loop_exit
      _
    %415 = vsyncpa [#allocation3], 1
    %s416 = scalar_lea.sflag [#allocation3], 1
    %417 = vsyncpa %s416, 1

</llo_original>
